<compile_context>
chip_gen: v6e
topology: v6e:2x2x1
jax: 0.10.0
libtpu: 0.0.40
codegen_flags: <defaults>
</compile_context>

<pallas_src>
import functools
import math

import jax
import jax.numpy as jnp
from jax.experimental import pallas as pl
from jax.experimental.pallas import tpu as pltpu

LANE = 128
BATCH_ALIGN = 16       # bf16 output sublane packing -> batch tiles are multiples of 16
MAX_BATCH_TILE = 512   # 512-row tiles reach ~85% of HBM roofline; few-MiB VMEM footprint


def _round_up(n, m):
    return ((n + m - 1) // m) * m


# -----------------------------------------------------------------------------
# Kernel
# -----------------------------------------------------------------------------
def _cortical_biokan_kernel(
    x_ref,                      # (TB, in_dim)      f32 (cast to bf16 in-kernel)
    w1k_ref, b1k_ref,           # (in_dim, P_h+P_k) bf16 / (1, P_h+P_k) f32   fused layer1 | biokan mlp1
    w234_ref, b234_ref,         # (P_h, 2*P_h) bf16 / (1, 2*P_h) f32          fused layer2_3 | layer4
    ws25_ref, bs25_ref,         # (P_h, P_o)  / (1, P_o)                      skip_2_5
    w5_ref, b5_ref,             # (P_h, P_o)  / (1, P_o)                      layer5 (L5)
    wk2_ref, bk2_ref,           # (P_k, P_o)  / (1, P_o)                      biokan mlp 2
    wi_ref, bi_ref,             # (2*P_o, P_o)/ (1, P_o)                      integration layer
    out_ref,                    # (TB, P_o) bf16
    *, bf16_eup, fuse_cat,
):
    f32 = jnp.float32
    bf16 = jnp.bfloat16
    P_h = w234_ref.shape[1] // 2
    P_o = wi_ref.shape[1]

    def tanh_(z):
        # On v6e/v7x the EUP supports packed bf16 (~2x transcendental throughput);
        # every tanh result here feeds a bf16 consumer (matmul or bf16 store) anyway.
        if bf16_eup:
            return jnp.tanh(z.astype(bf16))
        return jnp.tanh(z)

    x = x_ref[...].astype(bf16)

    # ----- Stage 1: fused x @ [w1 | wk1] (shared LHS), split at 128-aligned lane -----
    z1k = jnp.dot(x, w1k_ref[...], preferred_element_type=f32) + b1k_ref[...]
    z1 = z1k[:, :P_h]
    zk = z1k[:, P_h:]

    # L1: Linear -> (ACh factor == 1) -> tanh -> dropout(id) -> extra tanh (L1)
    l1 = tanh_(tanh_(z1))
    l1_bf = l1.astype(bf16)

    # BioKAN fallback MLP hidden: ReLU
    h = jnp.maximum(zk, 0.0).astype(bf16)

    # ----- Stage 2: fused l1 @ [w23 | w4] (shared LHS) -----
    z234 = jnp.dot(l1_bf, w234_ref[...], preferred_element_type=f32) + b234_ref[...]
    z23 = z234[:, :P_h]
    z4 = z234[:, P_h:]
    l23 = jnp.where(z23 > 0, z23, 0.1 * z23)                 # LeakyReLU(0.1), DA factor == 1
    l4 = jnp.maximum(z4, 0.0)                                # ReLU,           ACh factor == 1

    # skip_2_5 and L5 input (requires hidden_dim == output_dim, as in the torch code)
    skip25 = (jnp.dot(l23.astype(bf16), ws25_ref[...], preferred_element_type=f32)
              + bs25_ref[...])
    l5_in = (l4 + skip25).astype(bf16)

    # L5: Linear -> (DA factor == 1) -> tanh -> dropout(id) -> extra tanh (L5)
    l5 = tanh_(tanh_(
        jnp.dot(l5_in, w5_ref[...], preferred_element_type=f32) + b5_ref[...]))

    # CorticalModel output = tanh(l5_out)
    cortical = tanh_(l5).astype(bf16)

    # BioKAN MLP output
    biokan = tanh_(
        jnp.dot(h, wk2_ref[...], preferred_element_type=f32) + bk2_ref[...]).astype(bf16)

    # ----- Integration -----
    if fuse_cat:
        # v6e/v7x: single K=256 matmul matches the 256-deep MXU.
        cb = jnp.concatenate([cortical, biokan], axis=1)
        zi = jnp.dot(cb, wi_ref[...], preferred_element_type=f32) + bi_ref[...]
    else:
        # v5e (128-deep MXU): skip the concat copy, two 128-deep matmuls instead.
        zi = (jnp.dot(cortical, wi_ref[:P_o, :], preferred_element_type=f32)
              + jnp.dot(biokan, wi_ref[P_o:, :], preferred_element_type=f32)
              + bi_ref[...])

    out_ref[...] = tanh_(zi).astype(out_ref.dtype)


# -----------------------------------------------------------------------------
# Host-side packing (pad feature dims to lane width, fuse shared-LHS weights, bf16)
# -----------------------------------------------------------------------------
def _pad2(a, rows, cols, dtype):
    out = jnp.zeros((rows, cols), dtype)
    return out.at[: a.shape[0], : a.shape[1]].set(a.astype(dtype))


def pack_params(p):
    """Zero-pad hidden/output dims to 128 lanes, fuse [w1|wk1] and [w23|w4], cast to bf16.

    Padded weight columns AND the corresponding bias lanes are zero, so padded
    lanes stay exactly 0 through every stage (tanh(0)=0, relu(0)=0, leaky(0)=0)
    and never leak into the sliced output. The input feature dim (K of stage 1)
    is kept at its true width so the input never needs a lane-padding pass.
    """
    bf16, f32 = jnp.bfloat16, jnp.float32
    in_dim, hid = p["w1"].shape
    out_dim = p["w5"].shape[1]
    kan = p["wk1"].shape[1]
    P_h = _round_up(hid, LANE)
    P_o = _round_up(out_dim, LANE)
    P_k = _round_up(kan, LANE)

    # fused layer1 | biokan-mlp-1 (both consume x)
    w1k = jnp.concatenate(
        [_pad2(p["w1"], in_dim, P_h, bf16), _pad2(p["wk1"], in_dim, P_k, bf16)], axis=1)
    b1k = jnp.concatenate(
        [_pad2(p["b1"], 1, P_h, f32), _pad2(p["bk1"], 1, P_k, f32)], axis=1)
    # fused layer2_3 | layer4 (both consume l1)
    w234 = jnp.concatenate(
        [_pad2(p["w23"], P_h, P_h, bf16), _pad2(p["w4"], P_h, P_h, bf16)], axis=1)
    b234 = jnp.concatenate(
        [_pad2(p["b23"], 1, P_h, f32), _pad2(p["b4"], 1, P_h, f32)], axis=1)
    ws25 = _pad2(p["ws25"], P_h, P_o, bf16)
    bs25 = _pad2(p["bs25"], 1, P_o, f32)
    w5 = _pad2(p["w5"], P_h, P_o, bf16)
    b5 = _pad2(p["b5"], 1, P_o, f32)
    wk2 = _pad2(p["wk2"], P_k, P_o, bf16)
    bk2 = _pad2(p["bk2"], 1, P_o, f32)
    # integration weight: re-align its two row-halves to padded 128-row boundaries
    wi = jnp.zeros((2 * P_o, P_o), bf16)
    wi = wi.at[:out_dim, :out_dim].set(p["wi"][:out_dim].astype(bf16))
    wi = wi.at[P_o:P_o + out_dim, :out_dim].set(p["wi"][out_dim:].astype(bf16))
    bi = _pad2(p["bi"], 1, P_o, f32)

    return (w1k, b1k, w234, b234, ws25, bs25, w5, b5, wk2, bk2, wi, bi)


# -----------------------------------------------------------------------------
# Wrapper
# -----------------------------------------------------------------------------
@functools.partial(jax.jit, static_argnames=("out_dim", "bf16_eup", "fuse_cat"))
def cortical_biokan_forward(x, packed, *, out_dim, bf16_eup=True, fuse_cat=True):
    (w1k, b1k, w234, b234, ws25, bs25, w5, b5, wk2, bk2, wi, bi) = packed
    weight_args = (w1k, b1k, w234, b234, ws25, bs25, w5, b5, wk2, bk2, wi, bi)

    B, in_dim = x.shape
    P_h = w234.shape[1] // 2
    P_k = wk2.shape[0]
    P_o = wi.shape[1]

    # Batch tiling: pad batch to a 16-row boundary (bf16 sublane packing), then pick a
    # tile that (a) caps at MAX_BATCH_TILE and (b) gives >=2 grid steps when the batch
    # is big enough, so both v7x TensorCores are fed (single-TC chips just pipeline).
    Bp0 = _round_up(max(B, BATCH_ALIGN), BATCH_ALIGN)
    TB = min(MAX_BATCH_TILE,
             _round_up(max(BATCH_ALIGN, (Bp0 + 1) // 2), BATCH_ALIGN))
    Bp = _round_up(Bp0, TB)
    grid = (Bp // TB,)

    # Only the batch dim is padded (tiny copy, true feature width); cast to bf16
    # happens inside the kernel, so no lane-padded host slab is written to HBM.
    if Bp != B:
        xp = jnp.zeros((Bp, in_dim), x.dtype).at[:B].set(x)
    else:
        xp = x

    def const_spec(a):
        # Constant index_map -> weight fetched once, stays VMEM-resident across steps.
        return pl.BlockSpec(a.shape, lambda i: (0, 0))

    flops = 2 * Bp * (in_dim * (P_h + P_k) + P_h * (2 * P_h) + 2 * P_h * P_o
                      + P_k * P_o + (2 * P_o) * P_o)
    transcendentals = Bp * (2 * P_h + 5 * P_o)  # tanh evaluations
    bytes_accessed = (xp.size * xp.dtype.itemsize + Bp * P_o * 2
                      + sum(a.size * a.dtype.itemsize for a in weight_args))

    kernel = functools.partial(_cortical_biokan_kernel,
                               bf16_eup=bf16_eup, fuse_cat=fuse_cat)

    # Per-step VMEM footprint is a few MiB (x tile, bf16 out tile, ~0.5 MiB weights),
    # comfortably under the default scoped limit on every generation -> no override.
    out_p = pl.pallas_call(
        kernel,
        grid=grid,
        out_shape=jax.ShapeDtypeStruct((Bp, P_o), jnp.bfloat16),
        in_specs=[pl.BlockSpec((TB, in_dim), lambda i: (i, 0))]
                 + [const_spec(a) for a in weight_args],
        out_specs=pl.BlockSpec((TB, P_o), lambda i: (i, 0)),
        compiler_params=pltpu.CompilerParams(
            dimension_semantics=("parallel",),   # shard batch tiles across TCs (v7x)
        ),
        cost_estimate=pl.CostEstimate(
            flops=flops,
            transcendentals=transcendentals,
            bytes_accessed=bytes_accessed),
    )(xp, *weight_args)

    # bf16 result (post-tanh, in [-1,1]); caller casts to f32 only if it needs it.
    return out_p[:B, :out_dim]


# -----------------------------------------------------------------------------
# Params + references
# -----------------------------------------------------------------------------
def _linear_init(key, fan_in, fan_out):
    """PyTorch-style nn.Linear init: U(-1/sqrt(fan_in), 1/sqrt(fan_in)).
    Weights pre-transposed as (fan_in, fan_out); biases as (1, fan_out)."""
    kw, kb = jax.random.split(key)
    bound = 1.0 / math.sqrt(fan_in)
    w = jax.random.uniform(kw, (fan_in, fan_out), jnp.float32, -bound, bound)
    b = jax.random.uniform(kb, (1, fan_out), jnp.float32, -bound, bound)
    return w, b


def make_params(key, input_dim, hidden_dim, output_dim, kan_hidden_dim):
    assert hidden_dim == output_dim, (
        "torch code adds l4_out (hidden) + skip_2_5_out (output); requires equal dims")
    keys = jax.random.split(key, 8)
    p = {}
    p["w1"], p["b1"] = _linear_init(keys[0], input_dim, hidden_dim)
    p["w23"], p["b23"] = _linear_init(keys[1], hidden_dim, hidden_dim)
    p["w4"], p["b4"] = _linear_init(keys[2], hidden_dim, hidden_dim)
    p["ws25"], p["bs25"] = _linear_init(keys[3], hidden_dim, output_dim)
    p["w5"], p["b5"] = _linear_init(keys[4], hidden_dim, output_dim)
    p["wk1"], p["bk1"] = _linear_init(keys[5], input_dim, kan_hidden_dim)
    p["wk2"], p["bk2"] = _linear_init(keys[6], kan_hidden_dim, output_dim)
    p["wi"], p["bi"] = _linear_init(keys[7], 2 * output_dim, output_dim)
    return p


def reference_forward_bf16(x, p):
    """Pure-JAX reference matching the kernel's matmul arithmetic (bf16 operands,
    f32 accumulation; activations in f32)."""
    bf16, f32 = jnp.bfloat16, jnp.float32

    def mm(a, w):
        return jnp.dot(a.astype(bf16), w.astype(bf16), preferred_element_type=f32)

    l1 = jnp.tanh(jnp.tanh(mm(x, p["w1"]) + p["b1"]))
    z23 = mm(l1, p["w23"]) + p["b23"]
    l23 = jnp.where(z23 > 0, z23, 0.1 * z23)
    l4 = jnp.maximum(mm(l1, p["w4"]) + p["b4"], 0.0)
    skip25 = mm(l23, p["ws25"]) + p["bs25"]
    l5 = jnp.tanh(jnp.tanh(mm(l4 + skip25, p["w5"]) + p["b5"]))
    cortical = jnp.tanh(l5)
    h = jnp.maximum(mm(x, p["wk1"]) + p["bk1"], 0.0)
    biokan = jnp.tanh(mm(h, p["wk2"]) + p["bk2"])
    cb = jnp.concatenate([cortical, biokan], axis=1)
    return jnp.tanh(mm(cb, p["wi"]) + p["bi"])


def reference_forward_f32(x, p):
    """Full-precision torch-module semantics (sanity check for the bf16 casts)."""
    l1 = jnp.tanh(jnp.tanh(x @ p["w1"] + p["b1"]))
    z23 = l1 @ p["w23"] + p["b23"]
    l23 = jnp.where(z23 > 0, z23, 0.1 * z23)
    l4 = jnp.maximum(l1 @ p["w4"] + p["b4"], 0.0)
    skip25 = l23 @ p["ws25"] + p["bs25"]
    l5 = jnp.tanh(jnp.tanh((l4 + skip25) @ p["w5"] + p["b5"]))
    cortical = jnp.tanh(l5)
    h = jnp.maximum(x @ p["wk1"] + p["bk1"], 0.0)
    biokan = jnp.tanh(h @ p["wk2"] + p["bk2"])
    cb = jnp.concatenate([cortical, biokan], axis=1)
    return jnp.tanh(cb @ p["wi"] + p["bi"])


if __name__ == "__main__":
    # Small shapes consistent with the module: batch=2, input_dim=16,
    # hidden_dim=output_dim=32 (must match, see torch skip-add), kan_hidden_dim=64.
    B, INPUT_DIM, HIDDEN_DIM, OUTPUT_DIM, KAN_HIDDEN = 2, 16, 32, 32, 64

    key = jax.random.PRNGKey(0)
    kx, kp, kx2 = jax.random.split(key, 3)
    x = jax.random.normal(kx, (B, INPUT_DIM), jnp.float32)
    params = make_params(kp, INPUT_DIM, HIDDEN_DIM, OUTPUT_DIM, KAN_HIDDEN)
    packed = pack_params(params)

    # Generation-specific knobs: bf16 tanh (EUP) and the fused K=256 integration
    # matmul only pay off on v6e/v7x; older chips (v5e and earlier) use f32 tanh
    # and two 128-deep integration matmuls (no concat copy).
    kind = ""
    try:
        kind = jax.devices()[0].device_kind.lower()
    except Exception:
        pass
    older_gen = any(tag in kind for tag in ("v2", "v3", "v4", "v5"))
    bf16_eup = not older_gen
    fuse_cat = not older_gen

    out = cortical_biokan_forward(x, packed, out_dim=OUTPUT_DIM,
                                  bf16_eup=bf16_eup, fuse_cat=fuse_cat)
    out = jax.block_until_ready(out)
    assert out.shape == (B, OUTPUT_DIM)

    out_f32 = out.astype(jnp.float32)
    ref_bf16 = reference_forward_bf16(x, params)
    # bf16 output store (+ bf16 tanh on v6e/v7x) vs f32-activation reference.
    atol = 3e-2 if bf16_eup else 8e-3
    err = float(jnp.max(jnp.abs(out_f32 - ref_bf16)))
    assert err <= atol, f"Pallas kernel mismatch vs bf16-matched reference: {err}"
    ref_f32 = reference_forward_f32(x, params)
    drift = float(jnp.max(jnp.abs(out_f32 - ref_f32)))
    assert drift < 8e-2, f"Pallas kernel drifted too far from f32 module semantics: {drift}"

    # Exercise the batch grid / pipelining path (grid >= 2) with a larger batch.
    B2 = 300
    x2 = jax.random.normal(kx2, (B2, INPUT_DIM), jnp.float32)
    out2 = jax.block_until_ready(
        cortical_biokan_forward(x2, packed, out_dim=OUTPUT_DIM,
                                bf16_eup=bf16_eup, fuse_cat=fuse_cat))
    assert out2.shape == (B2, OUTPUT_DIM)
    err2 = float(jnp.max(jnp.abs(out2.astype(jnp.float32)
                                 - reference_forward_bf16(x2, params))))
    assert err2 <= atol, f"Pallas kernel mismatch vs reference (gridded batch): {err2}"

    print("KERNEL_OK")
</pallas_src>

<mosaic_0001>
module attributes {stable_mosaic.version = 11 : i64} {
  func.func @_cortical_biokan_kernel(%arg0: i32, %arg1: memref<16x16xf32, #tpu.memory_space<vmem>>, %arg2: memref<16x256xbf16, #tpu.memory_space<vmem>>, %arg3: memref<1x256xf32, #tpu.memory_space<vmem>>, %arg4: memref<128x256xbf16, #tpu.memory_space<vmem>>, %arg5: memref<1x256xf32, #tpu.memory_space<vmem>>, %arg6: memref<128x128xbf16, #tpu.memory_space<vmem>>, %arg7: memref<1x128xf32, #tpu.memory_space<vmem>>, %arg8: memref<128x128xbf16, #tpu.memory_space<vmem>>, %arg9: memref<1x128xf32, #tpu.memory_space<vmem>>, %arg10: memref<128x128xbf16, #tpu.memory_space<vmem>>, %arg11: memref<1x128xf32, #tpu.memory_space<vmem>>, %arg12: memref<256x128xbf16, #tpu.memory_space<vmem>>, %arg13: memref<1x128xf32, #tpu.memory_space<vmem>>, %arg14: memref<16x128xbf16, #tpu.memory_space<vmem>>) attributes {dimension_semantics = [#tpu.dimension_semantics<parallel>], iteration_bounds = array<i64: 1>, scalar_prefetch = 0 : i64, scratch_operands = 0 : i64, tpu.core_type = #tpu.core_type<tc>, window_params = [{transform_indices = @transform_0, window_bounds = array<i64: 16, 16>}, {pipeline_mode = #tpu.pipeline_mode<synchronous>, transform_indices = @transform_1, window_bounds = array<i64: 16, 256>}, {pipeline_mode = #tpu.pipeline_mode<synchronous>, transform_indices = @transform_2, window_bounds = array<i64: 1, 256>}, {pipeline_mode = #tpu.pipeline_mode<synchronous>, transform_indices = @transform_3, window_bounds = array<i64: 128, 256>}, {pipeline_mode = #tpu.pipeline_mode<synchronous>, transform_indices = @transform_4, window_bounds = array<i64: 1, 256>}, {pipeline_mode = #tpu.pipeline_mode<synchronous>, transform_indices = @transform_5, window_bounds = array<i64: 128, 128>}, {pipeline_mode = #tpu.pipeline_mode<synchronous>, transform_indices = @transform_6, window_bounds = array<i64: 1, 128>}, {pipeline_mode = #tpu.pipeline_mode<synchronous>, transform_indices = @transform_7, window_bounds = array<i64: 128, 128>}, {pipeline_mode = #tpu.pipeline_mode<synchronous>, transform_indices = @transform_8, window_bounds = array<i64: 1, 128>}, {pipeline_mode = #tpu.pipeline_mode<synchronous>, transform_indices = @transform_9, window_bounds = array<i64: 128, 128>}, {pipeline_mode = #tpu.pipeline_mode<synchronous>, transform_indices = @transform_10, window_bounds = array<i64: 1, 128>}, {pipeline_mode = #tpu.pipeline_mode<synchronous>, transform_indices = @transform_11, window_bounds = array<i64: 256, 128>}, {pipeline_mode = #tpu.pipeline_mode<synchronous>, transform_indices = @transform_12, window_bounds = array<i64: 1, 128>}, {transform_indices = @transform_13, window_bounds = array<i64: 16, 128>}]} {
    %c0 = arith.constant 0 : index
    %c0_0 = arith.constant 0 : index
    %0 = vector.load %arg1[%c0, %c0_0] : memref<16x16xf32, #tpu.memory_space<vmem>>, vector<16x16xf32>
    %1 = arith.truncf %0 : vector<16x16xf32> to vector<16x16xbf16>
    %c0_1 = arith.constant 0 : index
    %c0_2 = arith.constant 0 : index
    %2 = vector.load %arg2[%c0_1, %c0_2] : memref<16x256xbf16, #tpu.memory_space<vmem>>, vector<16x256xbf16>
    %cst = arith.constant dense<0.000000e+00> : vector<16x256xf32>
    %3 = tpu.matmul %1, %2, %cst {dimension_numbers = #tpu.dot_dimension_numbers<[1], [0], [0], [1], [0, 0, 1, 1], [], []>} : vector<16x16xbf16>, vector<16x256xbf16>, vector<16x256xf32> -> vector<16x256xf32>
    %c0_3 = arith.constant 0 : index
    %c0_4 = arith.constant 0 : index
    %4 = vector.load %arg3[%c0_3, %c0_4] : memref<1x256xf32, #tpu.memory_space<vmem>>, vector<1x256xf32>
    %5 = vector.broadcast %4 : vector<1x256xf32> to vector<16x256xf32>
    %6 = arith.addf %3, %5 : vector<16x256xf32>
    %7 = vector.extract_strided_slice %6 {offsets = [0, 0], sizes = [16, 128], strides = [1, 1]} : vector<16x256xf32> to vector<16x128xf32>
    %8 = vector.extract_strided_slice %6 {offsets = [0, 128], sizes = [16, 128], strides = [1, 1]} : vector<16x256xf32> to vector<16x128xf32>
    %9 = arith.truncf %7 : vector<16x128xf32> to vector<16x128xbf16>
    %10 = math.tanh %9 : vector<16x128xbf16>
    %11 = math.tanh %10 : vector<16x128xbf16>
    %cst_5 = arith.constant 0.000000e+00 : f32
    %12 = vector.broadcast %cst_5 : f32 to vector<16x128xf32>
    %13 = arith.maximumf %8, %12 : vector<16x128xf32>
    %14 = arith.truncf %13 : vector<16x128xf32> to vector<16x128xbf16>
    %c0_6 = arith.constant 0 : index
    %c0_7 = arith.constant 0 : index
    %15 = vector.load %arg4[%c0_6, %c0_7] : memref<128x256xbf16, #tpu.memory_space<vmem>>, vector<128x256xbf16>
    %cst_8 = arith.constant dense<0.000000e+00> : vector<16x256xf32>
    %16 = tpu.matmul %11, %15, %cst_8 {dimension_numbers = #tpu.dot_dimension_numbers<[1], [0], [0], [1], [0, 0, 1, 1], [], []>} : vector<16x128xbf16>, vector<128x256xbf16>, vector<16x256xf32> -> vector<16x256xf32>
    %c0_9 = arith.constant 0 : index
    %c0_10 = arith.constant 0 : index
    %17 = vector.load %arg5[%c0_9, %c0_10] : memref<1x256xf32, #tpu.memory_space<vmem>>, vector<1x256xf32>
    %18 = vector.broadcast %17 : vector<1x256xf32> to vector<16x256xf32>
    %19 = arith.addf %16, %18 : vector<16x256xf32>
    %20 = vector.extract_strided_slice %19 {offsets = [0, 0], sizes = [16, 128], strides = [1, 1]} : vector<16x256xf32> to vector<16x128xf32>
    %21 = vector.extract_strided_slice %19 {offsets = [0, 128], sizes = [16, 128], strides = [1, 1]} : vector<16x256xf32> to vector<16x128xf32>
    %cst_11 = arith.constant 0.000000e+00 : f32
    %22 = vector.broadcast %cst_11 : f32 to vector<16x128xf32>
    %23 = arith.cmpf ogt, %20, %22 : vector<16x128xf32>
    %cst_12 = arith.constant 1.000000e-01 : f32
    %24 = vector.broadcast %cst_12 : f32 to vector<16x128xf32>
    %25 = arith.mulf %24, %20 : vector<16x128xf32>
    %26 = arith.select %23, %20, %25 : vector<16x128xi1>, vector<16x128xf32>
    %cst_13 = arith.constant 0.000000e+00 : f32
    %27 = vector.broadcast %cst_13 : f32 to vector<16x128xf32>
    %28 = arith.maximumf %21, %27 : vector<16x128xf32>
    %29 = arith.truncf %26 : vector<16x128xf32> to vector<16x128xbf16>
    %c0_14 = arith.constant 0 : index
    %c0_15 = arith.constant 0 : index
    %30 = vector.load %arg6[%c0_14, %c0_15] : memref<128x128xbf16, #tpu.memory_space<vmem>>, vector<128x128xbf16>
    %cst_16 = arith.constant dense<0.000000e+00> : vector<16x128xf32>
    %31 = tpu.matmul %29, %30, %cst_16 {dimension_numbers = #tpu.dot_dimension_numbers<[1], [0], [0], [1], [0, 0, 1, 1], [], []>} : vector<16x128xbf16>, vector<128x128xbf16>, vector<16x128xf32> -> vector<16x128xf32>
    %c0_17 = arith.constant 0 : index
    %c0_18 = arith.constant 0 : index
    %32 = vector.load %arg7[%c0_17, %c0_18] : memref<1x128xf32, #tpu.memory_space<vmem>>, vector<1x128xf32>
    %33 = vector.broadcast %32 : vector<1x128xf32> to vector<16x128xf32>
    %34 = arith.addf %31, %33 : vector<16x128xf32>
    %35 = arith.addf %28, %34 : vector<16x128xf32>
    %36 = arith.truncf %35 : vector<16x128xf32> to vector<16x128xbf16>
    %c0_19 = arith.constant 0 : index
    %c0_20 = arith.constant 0 : index
    %37 = vector.load %arg8[%c0_19, %c0_20] : memref<128x128xbf16, #tpu.memory_space<vmem>>, vector<128x128xbf16>
    %cst_21 = arith.constant dense<0.000000e+00> : vector<16x128xf32>
    %38 = tpu.matmul %36, %37, %cst_21 {dimension_numbers = #tpu.dot_dimension_numbers<[1], [0], [0], [1], [0, 0, 1, 1], [], []>} : vector<16x128xbf16>, vector<128x128xbf16>, vector<16x128xf32> -> vector<16x128xf32>
    %c0_22 = arith.constant 0 : index
    %c0_23 = arith.constant 0 : index
    %39 = vector.load %arg9[%c0_22, %c0_23] : memref<1x128xf32, #tpu.memory_space<vmem>>, vector<1x128xf32>
    %40 = vector.broadcast %39 : vector<1x128xf32> to vector<16x128xf32>
    %41 = arith.addf %38, %40 : vector<16x128xf32>
    %42 = arith.truncf %41 : vector<16x128xf32> to vector<16x128xbf16>
    %43 = math.tanh %42 : vector<16x128xbf16>
    %44 = math.tanh %43 : vector<16x128xbf16>
    %45 = math.tanh %44 : vector<16x128xbf16>
    %c0_24 = arith.constant 0 : index
    %c0_25 = arith.constant 0 : index
    %46 = vector.load %arg10[%c0_24, %c0_25] : memref<128x128xbf16, #tpu.memory_space<vmem>>, vector<128x128xbf16>
    %cst_26 = arith.constant dense<0.000000e+00> : vector<16x128xf32>
    %47 = tpu.matmul %14, %46, %cst_26 {dimension_numbers = #tpu.dot_dimension_numbers<[1], [0], [0], [1], [0, 0, 1, 1], [], []>} : vector<16x128xbf16>, vector<128x128xbf16>, vector<16x128xf32> -> vector<16x128xf32>
    %c0_27 = arith.constant 0 : index
    %c0_28 = arith.constant 0 : index
    %48 = vector.load %arg11[%c0_27, %c0_28] : memref<1x128xf32, #tpu.memory_space<vmem>>, vector<1x128xf32>
    %49 = vector.broadcast %48 : vector<1x128xf32> to vector<16x128xf32>
    %50 = arith.addf %47, %49 : vector<16x128xf32>
    %51 = arith.truncf %50 : vector<16x128xf32> to vector<16x128xbf16>
    %52 = math.tanh %51 : vector<16x128xbf16>
    %53 = tpu.concatenate %45, %52 in 1 : vector<16x128xbf16>, vector<16x128xbf16> -> vector<16x256xbf16>
    %c0_29 = arith.constant 0 : index
    %c0_30 = arith.constant 0 : index
    %54 = vector.load %arg12[%c0_29, %c0_30] : memref<256x128xbf16, #tpu.memory_space<vmem>>, vector<256x128xbf16>
    %cst_31 = arith.constant dense<0.000000e+00> : vector<16x128xf32>
    %55 = tpu.matmul %53, %54, %cst_31 {dimension_numbers = #tpu.dot_dimension_numbers<[1], [0], [0], [1], [0, 0, 1, 1], [], []>} : vector<16x256xbf16>, vector<256x128xbf16>, vector<16x128xf32> -> vector<16x128xf32>
    %c0_32 = arith.constant 0 : index
    %c0_33 = arith.constant 0 : index
    %56 = vector.load %arg13[%c0_32, %c0_33] : memref<1x128xf32, #tpu.memory_space<vmem>>, vector<1x128xf32>
    %57 = vector.broadcast %56 : vector<1x128xf32> to vector<16x128xf32>
    %58 = arith.addf %55, %57 : vector<16x128xf32>
    %59 = arith.truncf %58 : vector<16x128xf32> to vector<16x128xbf16>
    %60 = math.tanh %59 : vector<16x128xbf16>
    %c0_34 = arith.constant 0 : index
    %c0_35 = arith.constant 0 : index
    %61 = vector.load %arg14[%c0_34, %c0_35] : memref<16x128xbf16, #tpu.memory_space<vmem>>, vector<16x128xbf16>
    tpu.vector_store %arg14[%c0_34, %c0_35], %60 {strides = array<i32>} : memref<16x128xbf16, #tpu.memory_space<vmem>>, vector<16x128xbf16>,
    return
  }
  func.func @transform_0(%arg0: i32) -> (i32, i32) {
    %c0_i32 = arith.constant 0 : i32
    %c0_i32_0 = arith.constant 0 : i32
    return %arg0, %c0_i32 : i32, i32
  }
  func.func @transform_1(%arg0: i32) -> (i32, i32) {
    %c0_i32 = arith.constant 0 : i32
    %c0_i32_0 = arith.constant 0 : i32
    %c0_i32_1 = arith.constant 0 : i32
    return %c0_i32, %c0_i32_0 : i32, i32
  }
  func.func @transform_2(%arg0: i32) -> (i32, i32) {
    %c0_i32 = arith.constant 0 : i32
    %c0_i32_0 = arith.constant 0 : i32
    %c0_i32_1 = arith.constant 0 : i32
    return %c0_i32, %c0_i32_0 : i32, i32
  }
  func.func @transform_3(%arg0: i32) -> (i32, i32) {
    %c0_i32 = arith.constant 0 : i32
    %c0_i32_0 = arith.constant 0 : i32
    %c0_i32_1 = arith.constant 0 : i32
    return %c0_i32, %c0_i32_0 : i32, i32
  }
  func.func @transform_4(%arg0: i32) -> (i32, i32) {
    %c0_i32 = arith.constant 0 : i32
    %c0_i32_0 = arith.constant 0 : i32
    %c0_i32_1 = arith.constant 0 : i32
    return %c0_i32, %c0_i32_0 : i32, i32
  }
  func.func @transform_5(%arg0: i32) -> (i32, i32) {
    %c0_i32 = arith.constant 0 : i32
    %c0_i32_0 = arith.constant 0 : i32
    %c0_i32_1 = arith.constant 0 : i32
    return %c0_i32, %c0_i32_0 : i32, i32
  }
  func.func @transform_6(%arg0: i32) -> (i32, i32) {
    %c0_i32 = arith.constant 0 : i32
    %c0_i32_0 = arith.constant 0 : i32
    %c0_i32_1 = arith.constant 0 : i32
    return %c0_i32, %c0_i32_0 : i32, i32
  }
  func.func @transform_7(%arg0: i32) -> (i32, i32) {
    %c0_i32 = arith.constant 0 : i32
    %c0_i32_0 = arith.constant 0 : i32
    %c0_i32_1 = arith.constant 0 : i32
    return %c0_i32, %c0_i32_0 : i32, i32
  }
  func.func @transform_8(%arg0: i32) -> (i32, i32) {
    %c0_i32 = arith.constant 0 : i32
    %c0_i32_0 = arith.constant 0 : i32
    %c0_i32_1 = arith.constant 0 : i32
    return %c0_i32, %c0_i32_0 : i32, i32
  }
  func.func @transform_9(%arg0: i32) -> (i32, i32) {
    %c0_i32 = arith.constant 0 : i32
    %c0_i32_0 = arith.constant 0 : i32
    %c0_i32_1 = arith.constant 0 : i32
    return %c0_i32, %c0_i32_0 : i32, i32
  }
  func.func @transform_10(%arg0: i32) -> (i32, i32) {
    %c0_i32 = arith.constant 0 : i32
    %c0_i32_0 = arith.constant 0 : i32
    %c0_i32_1 = arith.constant 0 : i32
    return %c0_i32, %c0_i32_0 : i32, i32
  }
  func.func @transform_11(%arg0: i32) -> (i32, i32) {
    %c0_i32 = arith.constant 0 : i32
    %c0_i32_0 = arith.constant 0 : i32
    %c0_i32_1 = arith.constant 0 : i32
    return %c0_i32, %c0_i32_0 : i32, i32
  }
  func.func @transform_12(%arg0: i32) -> (i32, i32) {
    %c0_i32 = arith.constant 0 : i32
    %c0_i32_0 = arith.constant 0 : i32
    %c0_i32_1 = arith.constant 0 : i32
    return %c0_i32, %c0_i32_0 : i32, i32
  }
  func.func @transform_13(%arg0: i32) -> (i32, i32) {
    %c0_i32 = arith.constant 0 : i32
    %c0_i32_0 = arith.constant 0 : i32
    return %arg0, %c0_i32 : i32, i32
  }
}

</mosaic_0001>

<llo_original>
// kernel: cortical_biokan_forward.1
$region0: #{cortical_biokan_forward.1}
  #allocation0 [shape = 'u32[]', space=smem, size = 0x4, offset = 0x4, fixed_abs, tag = 'smem constant byte address 0x4 - core index']
  #allocation1 [shape = 'u32[144,128]{1,0:T(1,128)}', space=vmem, size = 0x12000, scoped, tag = 'internal scratch']
  %s0 = inlined_call_operand.vmem [shape: f32[16,16], index: 0, kind: input, shape index: {}]
  %s1 = inlined_call_operand.vmem [shape: bf16[16,256], index: 1, kind: input, shape index: {}]
  %s2 = inlined_call_operand.vmem [shape: f32[1,256], index: 2, kind: input, shape index: {}]
  %s3 = inlined_call_operand.hbm [shape: bf16[128,256], index: 3, kind: input, shape index: {}]
  %s4 = inlined_call_operand.vmem [shape: f32[1,256], index: 4, kind: input, shape index: {}]
  %s5 = inlined_call_operand.hbm [shape: bf16[128,128], index: 5, kind: input, shape index: {}]
  %s6 = inlined_call_operand.vmem [shape: f32[1,128], index: 6, kind: input, shape index: {}]
  %s7 = inlined_call_operand.hbm [shape: bf16[128,128], index: 7, kind: input, shape index: {}]
  %s8 = inlined_call_operand.vmem [shape: f32[1,128], index: 8, kind: input, shape index: {}]
  %s9 = inlined_call_operand.hbm [shape: bf16[128,128], index: 9, kind: input, shape index: {}]
  %s10 = inlined_call_operand.vmem [shape: f32[1,128], index: 10, kind: input, shape index: {}]
  %s11 = inlined_call_operand.hbm [shape: bf16[256,128], index: 11, kind: input, shape index: {}]
  %s12 = inlined_call_operand.vmem [shape: f32[1,128], index: 12, kind: input, shape index: {}]
  %s13 = inlined_call_operand.vmem [shape: bf16[16,128], index: 13, kind: output, shape index: {}]
  %s14 = sld [smem:[#allocation0]]
  $region82: #{cortical_biokan_forward.1} parent=0
    _
  %s16 = ssub.s32 1, %s14
  %s17 = scalar_select 0, %s16, %s14
  $region1: #{cortical_biokan_forward.1} parent=0
    #allocation2 [shape = 'u8[65536]{0}', space=vmem, size = 0x10000, scoped, tag = 'input window, operand 3, single buffered']
    #allocation3 [shape = 's32[1]{0}', space=sflag, size = 0x4, scoped, tag = 'scoped memory for cortical_biokan_forward.1']
    #allocation4 [shape = 'u8[32768]{0}', space=vmem, size = 0x8000, scoped, tag = 'input window, operand 5, single buffered']
    #allocation5 [shape = 's32[1]{0}', space=sflag, size = 0x4, scoped, tag = 'scoped memory for cortical_biokan_forward.1']
    #allocation6 [shape = 'u8[32768]{0}', space=vmem, size = 0x8000, scoped, tag = 'input window, operand 7, single buffered']
    #allocation7 [shape = 'u8[32768]{0}', space=vmem, size = 0x8000, scoped, tag = 'input window, operand 9, single buffered']
    #allocation8 [shape = 's32[1]{0}', space=sflag, size = 0x4, scoped, tag = 'scoped memory for cortical_biokan_forward.1']
    #allocation9 [shape = 'u8[65536]{0}', space=vmem, size = 0x10000, scoped, tag = 'input window, operand 11, single buffered']
    %18 = vsyncpa [#allocation3], 0
    %19 = vsyncpa [#allocation5], 0
    %20 = vsyncpa [#allocation8], 0
    // Predicated region
    $region2: #{cortical_biokan_forward.1} parent=1 // pred_check
      _
    $region3: #{cortical_biokan_forward.1} parent=1 // pred_check_branch
      %22 = sbr.rel (0) target = $region5
    $region4: #{cortical_biokan_forward.1} parent=1 // pred_region
      _
    $region5: #{cortical_biokan_forward.1} parent=1 // pred_fallthru
      _
    // Predicated region
    $region6: #{cortical_biokan_forward.1} parent=1 // pred_check
      _
    $region7: #{cortical_biokan_forward.1} parent=1 // pred_check_branch
      %24 = sbr.rel (0) target = $region9
    $region8: #{cortical_biokan_forward.1} parent=1 // pred_region
      _
    $region9: #{cortical_biokan_forward.1} parent=1 // pred_fallthru
      _
    // Predicated region
    $region10: #{cortical_biokan_forward.1} parent=1 // pred_check
      _
    $region11: #{cortical_biokan_forward.1} parent=1 // pred_check_branch
      %26 = sbr.rel (0) target = $region13
    $region12: #{cortical_biokan_forward.1} parent=1 // pred_region
      _
    $region13: #{cortical_biokan_forward.1} parent=1 // pred_fallthru
      _
    // Predicated region
    $region14: #{cortical_biokan_forward.1} parent=1 // pred_check
      _
    $region15: #{cortical_biokan_forward.1} parent=1 // pred_check_branch
      %28 = sbr.rel (0) target = $region17
    $region16: #{cortical_biokan_forward.1} parent=1 // pred_region
      %s30 = ssub.s32 2048, 2048
      %31 = vsyncadd [#allocation3], %s30
      %s32 = sshll.u32 [#allocation2], 4
      %s33 = int_to_ptr.vmem [resolvable:$true] %s32
      %38 = dma.hbm_to_vmem [thread:$0]  %s3, 2048, %s33, [#allocation3], 128, 128, 8
    $region17: #{cortical_biokan_forward.1} parent=1 // pred_fallthru
      _
    // Predicated region
    $region18: #{cortical_biokan_forward.1} parent=1 // pred_check
      _
    $region19: #{cortical_biokan_forward.1} parent=1 // pred_check_branch
      %40 = sbr.rel (0) target = $region21
    $region20: #{cortical_biokan_forward.1} parent=1 // pred_region
      _
    $region21: #{cortical_biokan_forward.1} parent=1 // pred_fallthru
      _
    // Predicated region
    $region22: #{cortical_biokan_forward.1} parent=1 // pred_check
      _
    $region23: #{cortical_biokan_forward.1} parent=1 // pred_check_branch
      %42 = sbr.rel (0) target = $region25
    $region24: #{cortical_biokan_forward.1} parent=1 // pred_region
      %s44 = ssub.s32 1024, 1024
      %45 = vsyncadd [#allocation5], %s44
      %s46 = sshll.u32 [#allocation4], 4
      %s47 = int_to_ptr.vmem [resolvable:$true] %s46
      %52 = dma.hbm_to_vmem [thread:$0]  %s5, 1024, %s47, [#allocation5], 64, 64, 4
    $region25: #{cortical_biokan_forward.1} parent=1 // pred_fallthru
      _
    // Predicated region
    $region26: #{cortical_biokan_forward.1} parent=1 // pred_check
      _
    $region27: #{cortical_biokan_forward.1} parent=1 // pred_check_branch
      %54 = sbr.rel (0) target = $region29
    $region28: #{cortical_biokan_forward.1} parent=1 // pred_region
      _
    $region29: #{cortical_biokan_forward.1} parent=1 // pred_fallthru
      _
    // Predicated region
    $region30: #{cortical_biokan_forward.1} parent=1 // pred_check
      _
    $region31: #{cortical_biokan_forward.1} parent=1 // pred_check_branch
      %56 = sbr.rel (0) target = $region33
    $region32: #{cortical_biokan_forward.1} parent=1 // pred_region
      %s58 = ssub.s32 1024, 1024
      %59 = vsyncadd [#allocation5], %s58
      %s60 = sshll.u32 [#allocation6], 4
      %s61 = int_to_ptr.vmem [resolvable:$true] %s60
      %66 = dma.hbm_to_vmem [thread:$0]  %s7, 1024, %s61, [#allocation5], 64, 64, 4
    $region33: #{cortical_biokan_forward.1} parent=1 // pred_fallthru
      _
    // Predicated region
    $region34: #{cortical_biokan_forward.1} parent=1 // pred_check
      _
    $region35: #{cortical_biokan_forward.1} parent=1 // pred_check_branch
      %68 = sbr.rel (0) target = $region37
    $region36: #{cortical_biokan_forward.1} parent=1 // pred_region
      _
    $region37: #{cortical_biokan_forward.1} parent=1 // pred_fallthru
      _
    // Predicated region
    $region38: #{cortical_biokan_forward.1} parent=1 // pred_check
      _
    $region39: #{cortical_biokan_forward.1} parent=1 // pred_check_branch
      %70 = sbr.rel (0) target = $region41
    $region40: #{cortical_biokan_forward.1} parent=1 // pred_region
      %s72 = ssub.s32 1024, 1024
      %73 = vsyncadd [#allocation8], %s72
      %s74 = sshll.u32 [#allocation7], 4
      %s75 = int_to_ptr.vmem [resolvable:$true] %s74
      %80 = dma.hbm_to_vmem [thread:$0]  %s9, 1024, %s75, [#allocation8], 64, 64, 4
    $region41: #{cortical_biokan_forward.1} parent=1 // pred_fallthru
      _
    // Predicated region
    $region42: #{cortical_biokan_forward.1} parent=1 // pred_check
      _
    $region43: #{cortical_biokan_forward.1} parent=1 // pred_check_branch
      %82 = sbr.rel (0) target = $region45
    $region44: #{cortical_biokan_forward.1} parent=1 // pred_region
      _
    $region45: #{cortical_biokan_forward.1} parent=1 // pred_fallthru
      _
    // Predicated region
    $region46: #{cortical_biokan_forward.1} parent=1 // pred_check
      _
    $region47: #{cortical_biokan_forward.1} parent=1 // pred_check_branch
      %84 = sbr.rel (0) target = $region49
    $region48: #{cortical_biokan_forward.1} parent=1 // pred_region
      %s86 = ssub.s32 2048, 2048
      %87 = vsyncadd [#allocation8], %s86
      %s88 = sshll.u32 [#allocation9], 4
      %s89 = int_to_ptr.vmem [resolvable:$true] %s88
      %94 = dma.hbm_to_vmem [thread:$0]  %s11, 2048, %s89, [#allocation8], 64, 64, 4
    $region49: #{cortical_biokan_forward.1} parent=1 // pred_fallthru
      _
    // Predicated region
    $region50: #{cortical_biokan_forward.1} parent=1 // pred_check
      _
    $region51: #{cortical_biokan_forward.1} parent=1 // pred_check_branch
      %96 = sbr.rel (0) target = $region53
    $region52: #{cortical_biokan_forward.1} parent=1 // pred_region
      _
    $region53: #{cortical_biokan_forward.1} parent=1 // pred_fallthru
      _
    // Predicated region
    $region54: #{cortical_biokan_forward.1} parent=1 // pred_check
      _
    $region55: #{cortical_biokan_forward.1} parent=1 // pred_check_branch
      %98 = sbr.rel (0) target = $region57
    $region56: #{cortical_biokan_forward.1} parent=1 // pred_region
      %99 = dma.done [#allocation3], 2048
    $region57: #{cortical_biokan_forward.1} parent=1 // pred_fallthru
      _
    // Predicated region
    $region58: #{cortical_biokan_forward.1} parent=1 // pred_check
      _
    $region59: #{cortical_biokan_forward.1} parent=1 // pred_check_branch
      %101 = sbr.rel (0) target = $region61
    $region60: #{cortical_biokan_forward.1} parent=1 // pred_region
      %102 = dma.done [#allocation5], 1024
    $region61: #{cortical_biokan_forward.1} parent=1 // pred_fallthru
      _
    // Predicated region
    $region62: #{cortical_biokan_forward.1} parent=1 // pred_check
      _
    $region63: #{cortical_biokan_forward.1} parent=1 // pred_check_branch
      %104 = sbr.rel (0) target = $region65
    $region64: #{cortical_biokan_forward.1} parent=1 // pred_region
      %105 = dma.done [#allocation5], 1024
    $region65: #{cortical_biokan_forward.1} parent=1 // pred_fallthru
      _
    // Predicated region
    $region66: #{cortical_biokan_forward.1} parent=1 // pred_check
      _
    $region67: #{cortical_biokan_forward.1} parent=1 // pred_check_branch
      %107 = sbr.rel (0) target = $region69
    $region68: #{cortical_biokan_forward.1} parent=1 // pred_region
      %108 = dma.done [#allocation8], 1024
    $region69: #{cortical_biokan_forward.1} parent=1 // pred_fallthru
      _
    // Predicated region
    $region70: #{cortical_biokan_forward.1} parent=1 // pred_check
      _
    $region71: #{cortical_biokan_forward.1} parent=1 // pred_check_branch
      %110 = sbr.rel (0) target = $region73
    $region72: #{cortical_biokan_forward.1} parent=1 // pred_region
      %111 = dma.done [#allocation8], 2048
    $region73: #{cortical_biokan_forward.1} parent=1 // pred_fallthru
      _
    %v113 = vld [vmem:[%s0] sm:$0xff]
    %v114 = vld [vmem:[%s0 + $0x8] sm:$0xff]
    %v115 = vpack.c.bf16 %v114, %v113
    %v116 = vld [vmem:[%s1] sm:$0xff]
    %v117 = vld [vmem:[%s1 + $0x8] sm:$0xff]
    %v118 = vld [vmem:[%s2] sm:$0x3]
    %v120 = vlaneseq
    %v121 = vshrl.u32 %v120, 7
    %v122 = vsub.s32 0, %v121
    %v123 = vrot.slane %v118, %v122
    %v124 = vlaneseq
    %v125 = vshrl.u32 %v124, 7
    %v126 = vsub.s32 1, %v125
    %v127 = vrot.slane %v118, %v126
    %v132 = vunpack.c.l.b16 %v116
    %v133 = vunpack.c.h.b16 %v116
    %v134 = vunpack.c.l.b16 %v117
    %v135 = vunpack.c.h.b16 %v117
    %v136 = vpack.c.b16 %v134, %v132
    %v137 = vpack.c.b16 %v135, %v133
    %vm140 = vcmask 130048
    %v142 = vsel %vm140, %v115, 0
    %144 = vmatprep.subr.bf16.mxu0 0
    %145 = vmatpush1.bf16.msra.mxu0 0
    %146 = vmatprep.subr.bf16.mxu0 0
    %147 = vmatpush1.bf16.msra.mxu0 0
    %148 = vmatprep.subr.bf16.mxu0 0
    %149 = vmatpush1.bf16.msra.mxu0 0
    %150 = vmatprep.subr.bf16.mxu0 0
    %151 = vmatpush1.bf16.msra.mxu0 0
    %152 = vmatprep.subr.bf16.mxu0 0
    %153 = vmatpush1.bf16.msra.mxu0 0
    %154 = vmatprep.subr.bf16.mxu0 0
    %155 = vmatpush1.bf16.msra.mxu0 0
    %156 = vmatprep.subr.bf16.mxu0 0
    %157 = vmatpush1.bf16.msra.mxu0 0
    %158 = vmatprep.subr.bf16.mxu0 %v137
    %159 = vmatpush1.bf16.msra.mxu0 %v136
    %160 = vmatprep.subr.bf16.mxu0 0
    %161 = vmatpush2.bf16.msra.mxu0 0
    %162 = vmatprep.subr.bf16.mxu0 0
    %163 = vmatpush2.bf16.msra.mxu0 0
    %164 = vmatprep.subr.bf16.mxu0 0
    %165 = vmatpush2.bf16.msra.mxu0 0
    %166 = vmatprep.subr.bf16.mxu0 0
    %167 = vmatpush2.bf16.msra.mxu0 0
    %168 = vmatprep.subr.bf16.mxu0 0
    %169 = vmatpush2.bf16.msra.mxu0 0
    %170 = vmatprep.subr.bf16.mxu0 0
    %171 = vmatpush2.bf16.msra.mxu0 0
    %172 = vmatprep.subr.bf16.mxu0 0
    %173 = vmatpush2.bf16.msra.mxu0 0
    %174 = vmatprep.subr.bf16.mxu0 0
    %175 = vmatpush2.bf16.msra.mxu0 0
    %176 = vmatprep.mubr.bf16.mxu0 0
    %177 = vmatmul.mubr.bf16.gmra.mxu0 %v142
    %v178 = vpop.f32.mrf.mxu0
    %v179 = vadd.f32 %v123, %v178
    %v180 = vpop.f32.mrf.mxu0
    %v181 = vadd.f32 %v127, %v180
    %v182 = vpop.f32.mrf.mxu0
    %v183 = vadd.f32 %v123, %v182
    %v184 = vpop.f32.mrf.mxu0
    %v185 = vadd.f32 %v127, %v184
    %186 = vdwg.mxu0
    %v187 = vpack.c.bf16 %v183, %v179
    %v188 = vtanh.bf16.pop %v187
    %v189 = vtanh.bf16.pop %v188
    %v190 = vmax.f32 %v181, 0.0
    %v191 = vmax.f32 %v185, 0.0
    %v192 = vpack.c.bf16 %v191, %v190
    %v193 = vld [vmem:[#allocation2] sm:$0xff]
    %v194 = vld [vmem:[#allocation2 + $0x8] sm:$0xff]
    %v195 = vld [vmem:[#allocation2 + $0x10] sm:$0xff]
    %v196 = vld [vmem:[#allocation2 + $0x18] sm:$0xff]
    %v197 = vld [vmem:[#allocation2 + $0x20] sm:$0xff]
    %v198 = vld [vmem:[#allocation2 + $0x28] sm:$0xff]
    %v199 = vld [vmem:[#allocation2 + $0x30] sm:$0xff]
    %v200 = vld [vmem:[#allocation2 + $0x38] sm:$0xff]
    %v201 = vld [vmem:[#allocation2 + $0x40] sm:$0xff]
    %v202 = vld [vmem:[#allocation2 + $0x48] sm:$0xff]
    %v203 = vld [vmem:[#allocation2 + $0x50] sm:$0xff]
    %v204 = vld [vmem:[#allocation2 + $0x58] sm:$0xff]
    %v205 = vld [vmem:[#allocation2 + $0x60] sm:$0xff]
    %v206 = vld [vmem:[#allocation2 + $0x68] sm:$0xff]
    %v207 = vld [vmem:[#allocation2 + $0x70] sm:$0xff]
    %v208 = vld [vmem:[#allocation2 + $0x78] sm:$0xff]
    %v209 = vld [vmem:[%s4] sm:$0x3]
    %v211 = vlaneseq
    %v212 = vshrl.u32 %v211, 7
    %v213 = vsub.s32 0, %v212
    %v214 = vrot.slane %v209, %v213
    %v215 = vlaneseq
    %v216 = vshrl.u32 %v215, 7
    %v217 = vsub.s32 1, %v216
    %v218 = vrot.slane %v209, %v217
    %v237 = vunpack.c.l.b16 %v193
    %v238 = vunpack.c.h.b16 %v193
    %v239 = vunpack.c.l.b16 %v194
    %v240 = vunpack.c.h.b16 %v194
    %v241 = vunpack.c.l.b16 %v195
    %v242 = vunpack.c.h.b16 %v195
    %v243 = vunpack.c.l.b16 %v196
    %v244 = vunpack.c.h.b16 %v196
    %v245 = vunpack.c.l.b16 %v197
    %v246 = vunpack.c.h.b16 %v197
    %v247 = vunpack.c.l.b16 %v198
    %v248 = vunpack.c.h.b16 %v198
    %v249 = vunpack.c.l.b16 %v199
    %v250 = vunpack.c.h.b16 %v199
    %v251 = vunpack.c.l.b16 %v200
    %v252 = vunpack.c.h.b16 %v200
    %v253 = vunpack.c.l.b16 %v201
    %v254 = vunpack.c.h.b16 %v201
    %v255 = vunpack.c.l.b16 %v202
    %v256 = vunpack.c.h.b16 %v202
    %v257 = vunpack.c.l.b16 %v203
    %v258 = vunpack.c.h.b16 %v203
    %v259 = vunpack.c.l.b16 %v204
    %v260 = vunpack.c.h.b16 %v204
    %v261 = vunpack.c.l.b16 %v205
    %v262 = vunpack.c.h.b16 %v205
    %v263 = vunpack.c.l.b16 %v206
    %v264 = vunpack.c.h.b16 %v206
    %v265 = vunpack.c.l.b16 %v207
    %v266 = vunpack.c.h.b16 %v207
    %v267 = vunpack.c.l.b16 %v208
    %v268 = vunpack.c.h.b16 %v208
    %v269 = vpack.c.b16 %v239, %v237
    %v270 = vpack.c.b16 %v240, %v238
    %v271 = vpack.c.b16 %v243, %v241
    %v272 = vpack.c.b16 %v244, %v242
    %v273 = vpack.c.b16 %v247, %v245
    %v274 = vpack.c.b16 %v248, %v246
    %v275 = vpack.c.b16 %v251, %v249
    %v276 = vpack.c.b16 %v252, %v250
    %v277 = vpack.c.b16 %v255, %v253
    %v278 = vpack.c.b16 %v256, %v254
    %v279 = vpack.c.b16 %v259, %v257
    %v280 = vpack.c.b16 %v260, %v258
    %v281 = vpack.c.b16 %v263, %v261
    %v282 = vpack.c.b16 %v264, %v262
    %v283 = vpack.c.b16 %v267, %v265
    %v284 = vpack.c.b16 %v268, %v266
    %301 = vmatprep.subr.bf16.mxu0 %v284
    %302 = vmatpush1.bf16.msra.mxu0 %v283
    %303 = vmatprep.subr.bf16.mxu0 %v282
    %304 = vmatpush1.bf16.msra.mxu0 %v281
    %305 = vmatprep.subr.bf16.mxu0 %v280
    %306 = vmatpush1.bf16.msra.mxu0 %v279
    %307 = vmatprep.subr.bf16.mxu0 %v278
    %308 = vmatpush1.bf16.msra.mxu0 %v277
    %309 = vmatprep.subr.bf16.mxu0 %v276
    %310 = vmatpush1.bf16.msra.mxu0 %v275
    %311 = vmatprep.subr.bf16.mxu0 %v274
    %312 = vmatpush1.bf16.msra.mxu0 %v273
    %313 = vmatprep.subr.bf16.mxu0 %v272
    %314 = vmatpush1.bf16.msra.mxu0 %v271
    %315 = vmatprep.subr.bf16.mxu0 %v270
    %316 = vmatpush1.bf16.msra.mxu0 %v269
    %317 = vmatprep.subr.bf16.mxu0 0
    %318 = vmatpush2.bf16.msra.mxu0 0
    %319 = vmatprep.subr.bf16.mxu0 0
    %320 = vmatpush2.bf16.msra.mxu0 0
    %321 = vmatprep.subr.bf16.mxu0 0
    %322 = vmatpush2.bf16.msra.mxu0 0
    %323 = vmatprep.subr.bf16.mxu0 0
    %324 = vmatpush2.bf16.msra.mxu0 0
    %325 = vmatprep.subr.bf16.mxu0 0
    %326 = vmatpush2.bf16.msra.mxu0 0
    %327 = vmatprep.subr.bf16.mxu0 0
    %328 = vmatpush2.bf16.msra.mxu0 0
    %329 = vmatprep.subr.bf16.mxu0 0
    %330 = vmatpush2.bf16.msra.mxu0 0
    %331 = vmatprep.subr.bf16.mxu0 0
    %332 = vmatpush2.bf16.msra.mxu0 0
    %333 = vmatprep.mubr.bf16.mxu0 0
    %334 = vmatmul.mubr.bf16.gmra.mxu0 %v189
    %v335 = vpop.f32.mrf.mxu0
    %v336 = vadd.f32 %v214, %v335
    %v337 = vpop.f32.mrf.mxu0
    %v338 = vadd.f32 %v218, %v337
    %v339 = vpop.f32.mrf.mxu0
    %v340 = vadd.f32 %v214, %v339
    %v341 = vpop.f32.mrf.mxu0
    %v342 = vadd.f32 %v218, %v341
    %343 = vdwg.mxu0
    %vm344 = vcmp.gt.f32.partialorder %v336, 0.0
    %vm345 = vcmp.gt.f32.partialorder %v340, 0.0
    %v346 = vmul.f32 %v336, 0.1
    %v347 = vmul.f32 %v340, 0.1
    %v348 = vsel %vm344, %v336, %v346
    %v349 = vsel %vm345, %v340, %v347
    %v350 = vmax.f32 %v338, 0.0
    %v351 = vmax.f32 %v342, 0.0
    %v352 = vpack.c.bf16 %v349, %v348
    %v353 = vld [vmem:[#allocation4] sm:$0xf]
    %v354 = vld [vmem:[#allocation4 + $0x4] sm:$0xf]
    %v355 = vld [vmem:[#allocation4 + $0x8] sm:$0xf]
    %v356 = vld [vmem:[#allocation4 + $0xc] sm:$0xf]
    %v357 = vld [vmem:[#allocation4 + $0x10] sm:$0xf]
    %v358 = vld [vmem:[#allocation4 + $0x14] sm:$0xf]
    %v359 = vld [vmem:[#allocation4 + $0x18] sm:$0xf]
    %v360 = vld [vmem:[#allocation4 + $0x1c] sm:$0xf]
    %v361 = vld [vmem:[#allocation4 + $0x20] sm:$0xf]
    %v362 = vld [vmem:[#allocation4 + $0x24] sm:$0xf]
    %v363 = vld [vmem:[#allocation4 + $0x28] sm:$0xf]
    %v364 = vld [vmem:[#allocation4 + $0x2c] sm:$0xf]
    %v365 = vld [vmem:[#allocation4 + $0x30] sm:$0xf]
    %v366 = vld [vmem:[#allocation4 + $0x34] sm:$0xf]
    %v367 = vld [vmem:[#allocation4 + $0x38] sm:$0xf]
    %v368 = vld [vmem:[#allocation4 + $0x3c] sm:$0xf]
    %v369 = vld [vmem:[%s6] sm:$0x1]
    %v371 = vlaneseq
    %v372 = vshrl.u32 %v371, 7
    %v373 = vsub.s32 0, %v372
    %v374 = vrot.slane %v369, %v373
    %v392 = vunpack.c.l.b16 %v353
    %v393 = vunpack.c.l.b16 %v354
    %v394 = vunpack.c.l.b16 %v355
    %v395 = vunpack.c.l.b16 %v356
    %v396 = vunpack.c.l.b16 %v357
    %v397 = vunpack.c.l.b16 %v358
    %v398 = vunpack.c.l.b16 %v359
    %v399 = vunpack.c.l.b16 %v360
    %v400 = vunpack.c.l.b16 %v361
    %v401 = vunpack.c.l.b16 %v362
    %v402 = vunpack.c.l.b16 %v363
    %v403 = vunpack.c.l.b16 %v364
    %v404 = vunpack.c.l.b16 %v365
    %v405 = vunpack.c.l.b16 %v366
    %v406 = vunpack.c.l.b16 %v367
    %v407 = vunpack.c.l.b16 %v368
    %v408 = vpack.c.b16 %v393, %v392
    %v409 = vpack.c.b16 %v395, %v394
    %v410 = vpack.c.b16 %v397, %v396
    %v411 = vpack.c.b16 %v399, %v398
    %v412 = vpack.c.b16 %v401, %v400
    %v413 = vpack.c.b16 %v403, %v402
    %v414 = vpack.c.b16 %v405, %v404
    %v415 = vpack.c.b16 %v407, %v406
    %424 = vmatprep.subr.bf16.mxu0 0
    %425 = vmatpush1.bf16.msra.mxu0 %v415
    %426 = vmatprep.subr.bf16.mxu0 0
    %427 = vmatpush1.bf16.msra.mxu0 %v414
    %428 = vmatprep.subr.bf16.mxu0 0
    %429 = vmatpush1.bf16.msra.mxu0 %v413
    %430 = vmatprep.subr.bf16.mxu0 0
    %431 = vmatpush1.bf16.msra.mxu0 %v412
    %432 = vmatprep.subr.bf16.mxu0 0
    %433 = vmatpush1.bf16.msra.mxu0 %v411
    %434 = vmatprep.subr.bf16.mxu0 0
    %435 = vmatpush1.bf16.msra.mxu0 %v410
    %436 = vmatprep.subr.bf16.mxu0 0
    %437 = vmatpush1.bf16.msra.mxu0 %v409
    %438 = vmatprep.subr.bf16.mxu0 0
    %439 = vmatpush1.bf16.msra.mxu0 %v408
    %440 = vmatprep.subr.bf16.mxu0 0
    %441 = vmatpush2.bf16.msra.mxu0 0
    %442 = vmatprep.subr.bf16.mxu0 0
    %443 = vmatpush2.bf16.msra.mxu0 0
    %444 = vmatprep.subr.bf16.mxu0 0
    %445 = vmatpush2.bf16.msra.mxu0 0
    %446 = vmatprep.subr.bf16.mxu0 0
    %447 = vmatpush2.bf16.msra.mxu0 0
    %448 = vmatprep.subr.bf16.mxu0 0
    %449 = vmatpush2.bf16.msra.mxu0 0
    %450 = vmatprep.subr.bf16.mxu0 0
    %451 = vmatpush2.bf16.msra.mxu0 0
    %452 = vmatprep.subr.bf16.mxu0 0
    %453 = vmatpush2.bf16.msra.mxu0 0
    %454 = vmatprep.subr.bf16.mxu0 0
    %455 = vmatpush2.bf16.msra.mxu0 0
    %456 = vmatprep.mubr.bf16.mxu0 0
    %457 = vmatmul.mubr.bf16.gmra.mxu0 %v352
    %v458 = vpop.f32.mrf.mxu0
    %v459 = vadd.f32 %v374, %v458
    %v460 = vpop.f32.mrf.mxu0
    %v461 = vpop.f32.mrf.mxu0
    %v462 = vadd.f32 %v374, %v461
    %v463 = vpop.f32.mrf.mxu0
    %464 = vdwg.mxu0
    %v465 = vadd.f32 %v350, %v459
    %v466 = vadd.f32 %v351, %v462
    %v467 = vpack.c.bf16 %v466, %v465
    %v468 = vld [vmem:[#allocation6] sm:$0xf]
    %v469 = vld [vmem:[#allocation6 + $0x4] sm:$0xf]
    %v470 = vld [vmem:[#allocation6 + $0x8] sm:$0xf]
    %v471 = vld [vmem:[#allocation6 + $0xc] sm:$0xf]
    %v472 = vld [vmem:[#allocation6 + $0x10] sm:$0xf]
    %v473 = vld [vmem:[#allocation6 + $0x14] sm:$0xf]
    %v474 = vld [vmem:[#allocation6 + $0x18] sm:$0xf]
    %v475 = vld [vmem:[#allocation6 + $0x1c] sm:$0xf]
    %v476 = vld [vmem:[#allocation6 + $0x20] sm:$0xf]
    %v477 = vld [vmem:[#allocation6 + $0x24] sm:$0xf]
    %v478 = vld [vmem:[#allocation6 + $0x28] sm:$0xf]
    %v479 = vld [vmem:[#allocation6 + $0x2c] sm:$0xf]
    %v480 = vld [vmem:[#allocation6 + $0x30] sm:$0xf]
    %v481 = vld [vmem:[#allocation6 + $0x34] sm:$0xf]
    %v482 = vld [vmem:[#allocation6 + $0x38] sm:$0xf]
    %v483 = vld [vmem:[#allocation6 + $0x3c] sm:$0xf]
    %v484 = vld [vmem:[%s8] sm:$0x1]
    %v486 = vlaneseq
    %v487 = vshrl.u32 %v486, 7
    %v488 = vsub.s32 0, %v487
    %v489 = vrot.slane %v484, %v488
    %v507 = vunpack.c.l.b16 %v468
    %v508 = vunpack.c.l.b16 %v469
    %v509 = vunpack.c.l.b16 %v470
    %v510 = vunpack.c.l.b16 %v471
    %v511 = vunpack.c.l.b16 %v472
    %v512 = vunpack.c.l.b16 %v473
    %v513 = vunpack.c.l.b16 %v474
    %v514 = vunpack.c.l.b16 %v475
    %v515 = vunpack.c.l.b16 %v476
    %v516 = vunpack.c.l.b16 %v477
    %v517 = vunpack.c.l.b16 %v478
    %v518 = vunpack.c.l.b16 %v479
    %v519 = vunpack.c.l.b16 %v480
    %v520 = vunpack.c.l.b16 %v481
    %v521 = vunpack.c.l.b16 %v482
    %v522 = vunpack.c.l.b16 %v483
    %v523 = vpack.c.b16 %v508, %v507
    %v524 = vpack.c.b16 %v510, %v509
    %v525 = vpack.c.b16 %v512, %v511
    %v526 = vpack.c.b16 %v514, %v513
    %v527 = vpack.c.b16 %v516, %v515
    %v528 = vpack.c.b16 %v518, %v517
    %v529 = vpack.c.b16 %v520, %v519
    %v530 = vpack.c.b16 %v522, %v521
    %539 = vmatprep.subr.bf16.mxu0 0
    %540 = vmatpush1.bf16.msra.mxu0 %v530
    %541 = vmatprep.subr.bf16.mxu0 0
    %542 = vmatpush1.bf16.msra.mxu0 %v529
    %543 = vmatprep.subr.bf16.mxu0 0
    %544 = vmatpush1.bf16.msra.mxu0 %v528
    %545 = vmatprep.subr.bf16.mxu0 0
    %546 = vmatpush1.bf16.msra.mxu0 %v527
    %547 = vmatprep.subr.bf16.mxu0 0
    %548 = vmatpush1.bf16.msra.mxu0 %v526
    %549 = vmatprep.subr.bf16.mxu0 0
    %550 = vmatpush1.bf16.msra.mxu0 %v525
    %551 = vmatprep.subr.bf16.mxu0 0
    %552 = vmatpush1.bf16.msra.mxu0 %v524
    %553 = vmatprep.subr.bf16.mxu0 0
    %554 = vmatpush1.bf16.msra.mxu0 %v523
    %555 = vmatprep.subr.bf16.mxu0 0
    %556 = vmatpush2.bf16.msra.mxu0 0
    %557 = vmatprep.subr.bf16.mxu0 0
    %558 = vmatpush2.bf16.msra.mxu0 0
    %559 = vmatprep.subr.bf16.mxu0 0
    %560 = vmatpush2.bf16.msra.mxu0 0
    %561 = vmatprep.subr.bf16.mxu0 0
    %562 = vmatpush2.bf16.msra.mxu0 0
    %563 = vmatprep.subr.bf16.mxu0 0
    %564 = vmatpush2.bf16.msra.mxu0 0
    %565 = vmatprep.subr.bf16.mxu0 0
    %566 = vmatpush2.bf16.msra.mxu0 0
    %567 = vmatprep.subr.bf16.mxu0 0
    %568 = vmatpush2.bf16.msra.mxu0 0
    %569 = vmatprep.subr.bf16.mxu0 0
    %570 = vmatpush2.bf16.msra.mxu0 0
    %571 = vmatprep.mubr.bf16.mxu0 0
    %572 = vmatmul.mubr.bf16.gmra.mxu0 %v467
    %v573 = vpop.f32.mrf.mxu0
    %v574 = vadd.f32 %v489, %v573
    %v575 = vpop.f32.mrf.mxu0
    %v576 = vpop.f32.mrf.mxu0
    %v577 = vadd.f32 %v489, %v576
    %v578 = vpop.f32.mrf.mxu0
    %579 = vdwg.mxu0
    %v580 = vpack.c.bf16 %v577, %v574
    %v581 = vtanh.bf16.pop %v580
    %v582 = vtanh.bf16.pop %v581
    %v583 = vtanh.bf16.pop %v582
    %v584 = vld [vmem:[#allocation7] sm:$0xf]
    %v585 = vld [vmem:[#allocation7 + $0x4] sm:$0xf]
    %v586 = vld [vmem:[#allocation7 + $0x8] sm:$0xf]
    %v587 = vld [vmem:[#allocation7 + $0xc] sm:$0xf]
    %v588 = vld [vmem:[#allocation7 + $0x10] sm:$0xf]
    %v589 = vld [vmem:[#allocation7 + $0x14] sm:$0xf]
    %v590 = vld [vmem:[#allocation7 + $0x18] sm:$0xf]
    %v591 = vld [vmem:[#allocation7 + $0x1c] sm:$0xf]
    %v592 = vld [vmem:[#allocation7 + $0x20] sm:$0xf]
    %v593 = vld [vmem:[#allocation7 + $0x24] sm:$0xf]
    %v594 = vld [vmem:[#allocation7 + $0x28] sm:$0xf]
    %v595 = vld [vmem:[#allocation7 + $0x2c] sm:$0xf]
    %v596 = vld [vmem:[#allocation7 + $0x30] sm:$0xf]
    %v597 = vld [vmem:[#allocation7 + $0x34] sm:$0xf]
    %v598 = vld [vmem:[#allocation7 + $0x38] sm:$0xf]
    %v599 = vld [vmem:[#allocation7 + $0x3c] sm:$0xf]
    %v600 = vld [vmem:[%s10] sm:$0x1]
    %v602 = vlaneseq
    %v603 = vshrl.u32 %v602, 7
    %v604 = vsub.s32 0, %v603
    %v605 = vrot.slane %v600, %v604
    %v623 = vunpack.c.l.b16 %v584
    %v624 = vunpack.c.l.b16 %v585
    %v625 = vunpack.c.l.b16 %v586
    %v626 = vunpack.c.l.b16 %v587
    %v627 = vunpack.c.l.b16 %v588
    %v628 = vunpack.c.l.b16 %v589
    %v629 = vunpack.c.l.b16 %v590
    %v630 = vunpack.c.l.b16 %v591
    %v631 = vunpack.c.l.b16 %v592
    %v632 = vunpack.c.l.b16 %v593
    %v633 = vunpack.c.l.b16 %v594
    %v634 = vunpack.c.l.b16 %v595
    %v635 = vunpack.c.l.b16 %v596
    %v636 = vunpack.c.l.b16 %v597
    %v637 = vunpack.c.l.b16 %v598
    %v638 = vunpack.c.l.b16 %v599
    %v639 = vpack.c.b16 %v624, %v623
    %v640 = vpack.c.b16 %v626, %v625
    %v641 = vpack.c.b16 %v628, %v627
    %v642 = vpack.c.b16 %v630, %v629
    %v643 = vpack.c.b16 %v632, %v631
    %v644 = vpack.c.b16 %v634, %v633
    %v645 = vpack.c.b16 %v636, %v635
    %v646 = vpack.c.b16 %v638, %v637
    %655 = vmatprep.subr.bf16.mxu0 0
    %656 = vmatpush1.bf16.msra.mxu0 %v646
    %657 = vmatprep.subr.bf16.mxu0 0
    %658 = vmatpush1.bf16.msra.mxu0 %v645
    %659 = vmatprep.subr.bf16.mxu0 0
    %660 = vmatpush1.bf16.msra.mxu0 %v644
    %661 = vmatprep.subr.bf16.mxu0 0
    %662 = vmatpush1.bf16.msra.mxu0 %v643
    %663 = vmatprep.subr.bf16.mxu0 0
    %664 = vmatpush1.bf16.msra.mxu0 %v642
    %665 = vmatprep.subr.bf16.mxu0 0
    %666 = vmatpush1.bf16.msra.mxu0 %v641
    %667 = vmatprep.subr.bf16.mxu0 0
    %668 = vmatpush1.bf16.msra.mxu0 %v640
    %669 = vmatprep.subr.bf16.mxu0 0
    %670 = vmatpush1.bf16.msra.mxu0 %v639
    %671 = vmatprep.subr.bf16.mxu0 0
    %672 = vmatpush2.bf16.msra.mxu0 0
    %673 = vmatprep.subr.bf16.mxu0 0
    %674 = vmatpush2.bf16.msra.mxu0 0
    %675 = vmatprep.subr.bf16.mxu0 0
    %676 = vmatpush2.bf16.msra.mxu0 0
    %677 = vmatprep.subr.bf16.mxu0 0
    %678 = vmatpush2.bf16.msra.mxu0 0
    %679 = vmatprep.subr.bf16.mxu0 0
    %680 = vmatpush2.bf16.msra.mxu0 0
    %681 = vmatprep.subr.bf16.mxu0 0
    %682 = vmatpush2.bf16.msra.mxu0 0
    %683 = vmatprep.subr.bf16.mxu0 0
    %684 = vmatpush2.bf16.msra.mxu0 0
    %685 = vmatprep.subr.bf16.mxu0 0
    %686 = vmatpush2.bf16.msra.mxu0 0
    %687 = vmatprep.mubr.bf16.mxu0 0
    %688 = vmatmul.mubr.bf16.gmra.mxu0 %v192
    %v689 = vpop.f32.mrf.mxu0
    %v690 = vadd.f32 %v605, %v689
    %v691 = vpop.f32.mrf.mxu0
    %v692 = vpop.f32.mrf.mxu0
    %v693 = vadd.f32 %v605, %v692
    %v694 = vpop.f32.mrf.mxu0
    %695 = vdwg.mxu0
    %v696 = vpack.c.bf16 %v693, %v690
    %v697 = vtanh.bf16.pop %v696
    %v698 = vld [vmem:[#allocation9] sm:$0xf]
    %v699 = vld [vmem:[#allocation9 + $0x4] sm:$0xf]
    %v700 = vld [vmem:[#allocation9 + $0x8] sm:$0xf]
    %v701 = vld [vmem:[#allocation9 + $0xc] sm:$0xf]
    %v702 = vld [vmem:[#allocation9 + $0x10] sm:$0xf]
    %v703 = vld [vmem:[#allocation9 + $0x14] sm:$0xf]
    %v704 = vld [vmem:[#allocation9 + $0x18] sm:$0xf]
    %v705 = vld [vmem:[#allocation9 + $0x1c] sm:$0xf]
    %v706 = vld [vmem:[#allocation9 + $0x20] sm:$0xf]
    %v707 = vld [vmem:[#allocation9 + $0x24] sm:$0xf]
    %v708 = vld [vmem:[#allocation9 + $0x28] sm:$0xf]
    %v709 = vld [vmem:[#allocation9 + $0x2c] sm:$0xf]
    %v710 = vld [vmem:[#allocation9 + $0x30] sm:$0xf]
    %v711 = vld [vmem:[#allocation9 + $0x34] sm:$0xf]
    %v712 = vld [vmem:[#allocation9 + $0x38] sm:$0xf]
    %v713 = vld [vmem:[#allocation9 + $0x3c] sm:$0xf]
    %v714 = vld [vmem:[#allocation9 + $0x40] sm:$0xf]
    %v715 = vld [vmem:[#allocation9 + $0x44] sm:$0xf]
    %v716 = vld [vmem:[#allocation9 + $0x48] sm:$0xf]
    %v717 = vld [vmem:[#allocation9 + $0x4c] sm:$0xf]
    %v718 = vld [vmem:[#allocation9 + $0x50] sm:$0xf]
    %v719 = vld [vmem:[#allocation9 + $0x54] sm:$0xf]
    %v720 = vld [vmem:[#allocation9 + $0x58] sm:$0xf]
    %v721 = vld [vmem:[#allocation9 + $0x5c] sm:$0xf]
    %v722 = vld [vmem:[#allocation9 + $0x60] sm:$0xf]
    %v723 = vld [vmem:[#allocation9 + $0x64] sm:$0xf]
    %v724 = vld [vmem:[#allocation9 + $0x68] sm:$0xf]
    %v725 = vld [vmem:[#allocation9 + $0x6c] sm:$0xf]
    %v726 = vld [vmem:[#allocation9 + $0x70] sm:$0xf]
    %v727 = vld [vmem:[#allocation9 + $0x74] sm:$0xf]
    %v728 = vld [vmem:[#allocation9 + $0x78] sm:$0xf]
    %v729 = vld [vmem:[#allocation9 + $0x7c] sm:$0xf]
    %v730 = vld [vmem:[%s12] sm:$0x1]
    %v732 = vlaneseq
    %v733 = vshrl.u32 %v732, 7
    %v734 = vsub.s32 0, %v733
    %v735 = vrot.slane %v730, %v734
    %v769 = vunpack.c.l.b16 %v698
    %v770 = vunpack.c.l.b16 %v699
    %v771 = vunpack.c.l.b16 %v700
    %v772 = vunpack.c.l.b16 %v701
    %v773 = vunpack.c.l.b16 %v702
    %v774 = vunpack.c.l.b16 %v703
    %v775 = vunpack.c.l.b16 %v704
    %v776 = vunpack.c.l.b16 %v705
    %v777 = vunpack.c.l.b16 %v706
    %v778 = vunpack.c.l.b16 %v707
    %v779 = vunpack.c.l.b16 %v708
    %v780 = vunpack.c.l.b16 %v709
    %v781 = vunpack.c.l.b16 %v710
    %v782 = vunpack.c.l.b16 %v711
    %v783 = vunpack.c.l.b16 %v712
    %v784 = vunpack.c.l.b16 %v713
    %v785 = vunpack.c.l.b16 %v714
    %v786 = vunpack.c.l.b16 %v715
    %v787 = vunpack.c.l.b16 %v716
    %v788 = vunpack.c.l.b16 %v717
    %v789 = vunpack.c.l.b16 %v718
    %v790 = vunpack.c.l.b16 %v719
    %v791 = vunpack.c.l.b16 %v720
    %v792 = vunpack.c.l.b16 %v721
    %v793 = vunpack.c.l.b16 %v722
    %v794 = vunpack.c.l.b16 %v723
    %v795 = vunpack.c.l.b16 %v724
    %v796 = vunpack.c.l.b16 %v725
    %v797 = vunpack.c.l.b16 %v726
    %v798 = vunpack.c.l.b16 %v727
    %v799 = vunpack.c.l.b16 %v728
    %v800 = vunpack.c.l.b16 %v729
    %v801 = vpack.c.b16 %v770, %v769
    %v802 = vpack.c.b16 %v772, %v771
    %v803 = vpack.c.b16 %v774, %v773
    %v804 = vpack.c.b16 %v776, %v775
    %v805 = vpack.c.b16 %v778, %v777
    %v806 = vpack.c.b16 %v780, %v779
    %v807 = vpack.c.b16 %v782, %v781
    %v808 = vpack.c.b16 %v784, %v783
    %v809 = vpack.c.b16 %v786, %v785
    %v810 = vpack.c.b16 %v788, %v787
    %v811 = vpack.c.b16 %v790, %v789
    %v812 = vpack.c.b16 %v792, %v791
    %v813 = vpack.c.b16 %v794, %v793
    %v814 = vpack.c.b16 %v796, %v795
    %v815 = vpack.c.b16 %v798, %v797
    %v816 = vpack.c.b16 %v800, %v799
    %833 = vmatprep.subr.bf16.mxu0 0
    %834 = vmatpush1.bf16.msra.mxu0 %v808
    %835 = vmatprep.subr.bf16.mxu0 0
    %836 = vmatpush1.bf16.msra.mxu0 %v807
    %837 = vmatprep.subr.bf16.mxu0 0
    %838 = vmatpush1.bf16.msra.mxu0 %v806
    %839 = vmatprep.subr.bf16.mxu0 0
    %840 = vmatpush1.bf16.msra.mxu0 %v805
    %841 = vmatprep.subr.bf16.mxu0 0
    %842 = vmatpush1.bf16.msra.mxu0 %v804
    %843 = vmatprep.subr.bf16.mxu0 0
    %844 = vmatpush1.bf16.msra.mxu0 %v803
    %845 = vmatprep.subr.bf16.mxu0 0
    %846 = vmatpush1.bf16.msra.mxu0 %v802
    %847 = vmatprep.subr.bf16.mxu0 0
    %848 = vmatpush1.bf16.msra.mxu0 %v801
    %849 = vmatprep.subr.bf16.mxu0 0
    %850 = vmatpush2.bf16.msra.mxu0 %v816
    %851 = vmatprep.subr.bf16.mxu0 0
    %852 = vmatpush2.bf16.msra.mxu0 %v815
    %853 = vmatprep.subr.bf16.mxu0 0
    %854 = vmatpush2.bf16.msra.mxu0 %v814
    %855 = vmatprep.subr.bf16.mxu0 0
    %856 = vmatpush2.bf16.msra.mxu0 %v813
    %857 = vmatprep.subr.bf16.mxu0 0
    %858 = vmatpush2.bf16.msra.mxu0 %v812
    %859 = vmatprep.subr.bf16.mxu0 0
    %860 = vmatpush2.bf16.msra.mxu0 %v811
    %861 = vmatprep.subr.bf16.mxu0 0
    %862 = vmatpush2.bf16.msra.mxu0 %v810
    %863 = vmatprep.subr.bf16.mxu0 0
    %864 = vmatpush2.bf16.msra.mxu0 %v809
    %865 = vmatprep.mubr.bf16.mxu0 %v697
    %866 = vmatmul.mubr.bf16.gmra.mxu0 %v583
    %v867 = vpop.f32.mrf.mxu0
    %v868 = vadd.f32 %v735, %v867
    %v869 = vpop.f32.mrf.mxu0
    %v870 = vpop.f32.mrf.mxu0
    %v871 = vadd.f32 %v735, %v870
    %v872 = vpop.f32.mrf.mxu0
    %873 = vdwg.mxu0
    %v874 = vpack.c.bf16 %v871, %v868
    %v875 = vtanh.bf16.pop %v874
    %v877 = vunpack.c.l.b16 %v875
    %v878 = vunpack.c.h.b16 %v875
    %v879 = vpack.c.b16 %v877, %v877
    %v880 = vpack.c.b16 %v878, %v878
    %883 = vst [vmem:[%s13] sm:$0xf] %v879
    %884 = vst [vmem:[%s13 + $0x4] sm:$0xf] %v880
    // Predicated region
    $region74: #{cortical_biokan_forward.1} parent=1 // pred_check
      _
    $region75: #{cortical_biokan_forward.1} parent=1 // pred_check_branch
      %886 = sbr.rel (0) target = $region77
    $region76: #{cortical_biokan_forward.1} parent=1 // pred_region
      _
    $region77: #{cortical_biokan_forward.1} parent=1 // pred_fallthru
      _
    // Predicated region
    $region78: #{cortical_biokan_forward.1} parent=1 // pred_check
      _
    $region79: #{cortical_biokan_forward.1} parent=1 // pred_check_branch
      %888 = sbr.rel (0) target = $region81
    $region80: #{cortical_biokan_forward.1} parent=1 // pred_region
      _
    $region81: #{cortical_biokan_forward.1} parent=1 // pred_fallthru
      _
    %889 = vsyncpa [#allocation3], 1
    %890 = vsyncpa [#allocation5], 1
    %891 = vsyncpa [#allocation8], 1

</llo_original>
